<compile_context>
chip_gen: v6e
topology: v6e:2x2x1
jax: 0.10.0
libtpu: 0.0.40
codegen_flags: <defaults>
</compile_context>

<pallas_src>
import functools

import jax
import jax.numpy as jnp
from jax.experimental import pallas as pl
from jax.experimental.pallas import tpu as pltpu


def _round_up(a, b):
    return ((a + b - 1) // b) * b


def _vq_kernel(x_ref, w_ref, wsq_ref, q_ref, ind_ref, loss_ref, *,
               tile_n, k_pad, d, n_valid, needs_mask, fixed_idx):
    x = x_ref[...]                                   # (tile_n, D) f32
    w = w_ref[...]                                   # (k_pad, D) f32

    if fixed_idx is None:
        # Distances up to a per-row constant: ||w||^2 - 2 * x . w
        xw = jax.lax.dot_general(
            x, w, (((1,), (1,)), ((), ())),
            preferred_element_type=jnp.float32)      # (tile_n, k_pad)
        dist = wsq_ref[...] - 2.0 * xw               # (tile_n, k_pad)

        # First-occurrence argmin over the codebook; padded entries carry a
        # huge ||w||^2 so they never win.
        iota_k = jax.lax.broadcasted_iota(jnp.int32, dist.shape, 1)
        dmin = jnp.min(dist, axis=1, keepdims=True)                  # (tile_n, 1)
        idx = jnp.min(jnp.where(dist == dmin, iota_k, k_pad),
                      axis=1, keepdims=True)                         # (tile_n, 1)

        # One-hot encodings and quantization (matches scatter_ + matmul).
        enc = (iota_k == idx).astype(jnp.float32)                    # (tile_n, k_pad)
        quant = jnp.dot(enc, w, preferred_element_type=jnp.float32)  # (tile_n, D)

        # Lane-major indices: (1, k_pad) iota row contracted with the one-hot
        # rows -> (1, tile_n) already in lane layout (single unmasked store).
        k_row = jax.lax.broadcasted_iota(
            jnp.int32, (1, k_pad), 1).astype(jnp.float32)
        idx_row = jax.lax.dot_general(
            k_row, enc, (((1,), (1,)), ((), ())),
            preferred_element_type=jnp.float32)                      # (1, tile_n)
        ind_ref[...] = idx_row.astype(jnp.int32).reshape(1, 1, tile_n)
    else:
        # Fixed-index path: no distance GEMM / argmin at all.
        wrow = w_ref[pl.ds(fixed_idx, 1), :]                         # (1, D)
        quant = jnp.broadcast_to(wrow, (tile_n, d)).astype(jnp.float32)
        ind_ref[...] = jnp.full((1, 1, tile_n), fixed_idx, dtype=jnp.int32)

    # Straight-through estimator: x + (q - x).detach() == q numerically.
    q_ref[...] = quant

    # Per-tile, per-lane partial sum of (q - x)^2 (rows reduced only; cross-lane
    # reduction finishes in the fused wrapper epilogue).  Garbage rows of a
    # ragged last tile are masked out here.
    diff = quant - x
    sq = diff * diff
    if needs_mask:
        rows = (pl.program_id(0) * tile_n
                + jax.lax.broadcasted_iota(jnp.int32, (tile_n, 1), 0))
        sq = jnp.where(rows < n_valid, sq, 0.0)
    loss_ref[...] = jnp.sum(sq, axis=0, keepdims=True).reshape(1, 1, d)


def _tpu_tuning():
    """Return (row-tile cap, scoped-VMEM limit bytes, two-core hint)."""
    try:
        vmem_cap = int(pltpu.get_tpu_info().vmem_capacity_bytes)
    except Exception:
        vmem_cap = 64 * 1024 * 1024          # conservative: assume v7x-class VMEM
    if vmem_cap >= 96 * 1024 * 1024:         # v5e / v6e: 128 MiB VMEM, 1 TC
        return 8192, 64 * 1024 * 1024, False
    # v7x: 64 MiB VMEM per TensorCore, 2 TCs, 3.2 TB/s HBM.
    return 4096, 48 * 1024 * 1024, True


@functools.partial(jax.jit, static_argnames=("index", "beta", "tile_n"))
def _vq_gcn_forward(inputs, embed_weight, index, beta, tile_n):
    K, D = embed_weight.shape
    flat = inputs.reshape(-1, D).astype(jnp.float32)
    N = flat.shape[0]

    tile_cap, vmem_limit, two_cores = _tpu_tuning()
    if tile_n is not None:
        tile_cap = int(tile_n)

    # Row tile: multiple of 8 sublanes, capped per-generation.
    tile = _round_up(min(tile_cap, _round_up(N, 8)), 8)
    if two_cores:
        # Keep >= 2 grid steps so the "parallel" axis can span both cores.
        tile = max(8, min(tile, _round_up(pl.cdiv(N, 2), 8)))
    num_tiles = pl.cdiv(N, tile)
    needs_mask = (N % tile) != 0

    # Codebook padded to a lane-dense K; padded rows get a huge squared norm so
    # they are never the argmin.  (Tiny; fused under jit.)
    k_pad = _round_up(K, 128)
    assert k_pad < (1 << 24), "f32 index extraction requires K < 2^24"
    w = embed_weight.astype(jnp.float32)
    w_pad = jnp.zeros((k_pad, D), jnp.float32).at[:K, :].set(w)
    wsq = jnp.full((1, k_pad), 1e30, jnp.float32).at[0, :K].set(
        jnp.sum(w * w, axis=1))

    kernel = functools.partial(
        _vq_kernel, tile_n=tile, k_pad=k_pad, d=D, n_valid=N,
        needs_mask=needs_mask, fixed_idx=index)

    q, ind, loss_part = pl.pallas_call(
        kernel,
        out_shape=(
            jax.ShapeDtypeStruct((N, D), jnp.float32),               # no pad/slice
            jax.ShapeDtypeStruct((num_tiles, 1, tile), jnp.int32),
            jax.ShapeDtypeStruct((num_tiles, 1, D), jnp.float32),
        ),
        grid_spec=pltpu.PrefetchScalarGridSpec(
            num_scalar_prefetch=0,
            grid=(num_tiles,),
            in_specs=[
                pl.BlockSpec((tile, D), lambda i: (i, 0)),     # x tile (ragged tail ok)
                pl.BlockSpec((k_pad, D), lambda i: (0, 0)),    # codebook (resident)
                pl.BlockSpec((1, k_pad), lambda i: (0, 0)),    # ||w||^2 (resident)
            ],
            out_specs=[
                pl.BlockSpec((tile, D), lambda i: (i, 0)),         # quantized
                pl.BlockSpec((1, 1, tile), lambda i: (i, 0, 0)),   # indices (lane-dense)
                pl.BlockSpec((1, 1, D), lambda i: (i, 0, 0)),      # loss lane-partials
            ],
        ),
        compiler_params=pltpu.CompilerParams(
            dimension_semantics=("parallel",),
            vmem_limit_bytes=vmem_limit),
    )(flat, w_pad, wsq)

    quantized = q.reshape(inputs.shape)
    encoding_indices = ind.reshape(-1)[:N].reshape(N, 1)
    # mean((q.detach()-x)^2) + beta*mean((q-x.detach())^2) == (1+beta)*mean((q-x)^2)
    commitloss = (1.0 + beta) * jnp.sum(loss_part) / (N * D)
    contrastloss = jnp.float32(0.0)   # torch code returns a constant 0.0 tensor
    return quantized, encoding_indices, commitloss, contrastloss


def vector_quantizer_gcn(inputs, embed_weight, index=None, beta=0.25,
                         tile_n=None):
    """Forward pass of VectorQuantizer_gcn.

    Returns (quantized, encoding_indices, commitloss, contrastloss).
    """
    if index is not None:
        index = int(index)
        if not (0 <= index < embed_weight.shape[0]):
            raise ValueError(
                f"index {index} out of range for codebook of size "
                f"{embed_weight.shape[0]}")
    return _vq_gcn_forward(inputs, embed_weight, index, float(beta),
                           None if tile_n is None else int(tile_n))


if __name__ == "__main__":
    # Module defaults: num_embeddings=50, embedding_dim=192.
    num_embeddings = 50
    embedding_dim = 192
    batch = 8            # inputs.view(-1, embedding_dim) -> (8, 192)

    key = jax.random.PRNGKey(0)
    k_x, k_w, k_x2 = jax.random.split(key, 3)

    # embed.weight.data.uniform_(-1/num_embeddings, 1/num_embeddings)
    embed_weight = jax.random.uniform(
        k_w, (num_embeddings, embedding_dim),
        minval=-1.0 / num_embeddings, maxval=1.0 / num_embeddings,
        dtype=jnp.float32)
    inputs = jax.random.normal(k_x, (batch, embedding_dim), dtype=jnp.float32)

    # --- main path (index=None) ---
    quantized, enc_idx, commitloss, contrastloss = vector_quantizer_gcn(
        inputs, embed_weight, index=None, beta=0.25)
    jax.block_until_ready((quantized, enc_idx, commitloss, contrastloss))

    d_ref = (jnp.sum(inputs ** 2, axis=1, keepdims=True)
             + jnp.sum(embed_weight ** 2, axis=1)
             - 2.0 * inputs @ embed_weight.T)
    idx_ref = jnp.argmin(d_ref, axis=1)
    q_ref = embed_weight[idx_ref]
    loss_ref = (1.0 + 0.25) * jnp.mean((q_ref - inputs) ** 2)
    assert enc_idx.shape == (batch, 1)
    assert jnp.array_equal(enc_idx[:, 0], idx_ref.astype(jnp.int32))
    assert jnp.allclose(quantized, q_ref, atol=1e-5)
    assert jnp.allclose(commitloss, loss_ref, atol=1e-5)

    # --- fixed-index path (torch: index != None) ---
    q_fix, idx_fix, loss_fix, _ = vector_quantizer_gcn(
        inputs, embed_weight, index=3, beta=0.25)
    jax.block_until_ready((q_fix, idx_fix, loss_fix))
    assert jnp.all(idx_fix[:, 0] == 3)
    assert jnp.allclose(q_fix, jnp.broadcast_to(embed_weight[3], inputs.shape),
                        atol=1e-6)
    assert jnp.allclose(loss_fix,
                        1.25 * jnp.mean((embed_weight[3][None, :] - inputs) ** 2),
                        atol=1e-5)

    # --- multi-tile + ragged-last-block path (N=20, tile_n=8 -> 3 tiles) ---
    inputs2 = jax.random.normal(k_x2, (20, embedding_dim), dtype=jnp.float32)
    q3, idx3, loss3, _ = vector_quantizer_gcn(inputs2, embed_weight,
                                              beta=0.25, tile_n=8)
    jax.block_until_ready((q3, idx3, loss3))
    d3 = (jnp.sum(inputs2 ** 2, axis=1, keepdims=True)
          + jnp.sum(embed_weight ** 2, axis=1)
          - 2.0 * inputs2 @ embed_weight.T)
    i3 = jnp.argmin(d3, axis=1)
    q3_ref = embed_weight[i3]
    assert jnp.array_equal(idx3[:, 0], i3.astype(jnp.int32))
    assert jnp.allclose(q3, q3_ref, atol=1e-5)
    assert jnp.allclose(loss3, 1.25 * jnp.mean((q3_ref - inputs2) ** 2), atol=1e-5)

    print("KERNEL_OK")
</pallas_src>

<mosaic_0001>
module attributes {stable_mosaic.version = 11 : i64} {
  func.func @_vq_kernel(%arg0: i32, %arg1: memref<8x192xf32, #tpu.memory_space<vmem>>, %arg2: memref<128x192xf32, #tpu.memory_space<vmem>>, %arg3: memref<1x128xf32, #tpu.memory_space<vmem>>, %arg4: memref<8x192xf32, #tpu.memory_space<vmem>>, %arg5: memref<1x1x8xi32, #tpu.memory_space<vmem>>, %arg6: memref<1x1x192xf32, #tpu.memory_space<vmem>>) attributes {dimension_semantics = [#tpu.dimension_semantics<parallel>], iteration_bounds = array<i64: 1>, scalar_prefetch = 0 : i64, scratch_operands = 0 : i64, tpu.core_type = #tpu.core_type<tc>, window_params = [{transform_indices = @transform_0, window_bounds = array<i64: 8, 192>}, {pipeline_mode = #tpu.pipeline_mode<synchronous>, transform_indices = @transform_1, window_bounds = array<i64: 128, 192>}, {pipeline_mode = #tpu.pipeline_mode<synchronous>, transform_indices = @transform_2, window_bounds = array<i64: 1, 128>}, {transform_indices = @transform_3, window_bounds = array<i64: 8, 192>}, {transform_indices = @transform_4, window_bounds = array<i64: 1, 1, 8>}, {transform_indices = @transform_5, window_bounds = array<i64: 1, 1, 192>}]} {
    %c0 = arith.constant 0 : index
    %c0_0 = arith.constant 0 : index
    %0 = vector.load %arg1[%c0, %c0_0] : memref<8x192xf32, #tpu.memory_space<vmem>>, vector<8x192xf32>
    %c0_1 = arith.constant 0 : index
    %c0_2 = arith.constant 0 : index
    %1 = vector.load %arg2[%c0_1, %c0_2] : memref<128x192xf32, #tpu.memory_space<vmem>>, vector<128x192xf32>
    %cst = arith.constant dense<0.000000e+00> : vector<8x128xf32>
    %2 = tpu.matmul %0, %1, %cst {dimension_numbers = #tpu.dot_dimension_numbers<[1], [1], [0], [0], [0, 0, 1, 0], [], []>} : vector<8x192xf32>, vector<128x192xf32>, vector<8x128xf32> -> vector<8x128xf32>
    %c0_3 = arith.constant 0 : index
    %c0_4 = arith.constant 0 : index
    %3 = vector.load %arg3[%c0_3, %c0_4] : memref<1x128xf32, #tpu.memory_space<vmem>>, vector<1x128xf32>
    %cst_5 = arith.constant 2.000000e+00 : f32
    %4 = vector.broadcast %cst_5 : f32 to vector<8x128xf32>
    %5 = arith.mulf %4, %2 : vector<8x128xf32>
    %6 = vector.broadcast %3 : vector<1x128xf32> to vector<8x128xf32>
    %7 = arith.subf %6, %5 : vector<8x128xf32>
    %8 = tpu.iota {dimensions = array<i32: 1>} : vector<8x128xi32>
    %cst_6 = arith.constant dense<0x7F800000> : vector<8xf32>
    %9 = vector.multi_reduction <minimumf>, %7, %cst_6 [1] : vector<8x128xf32> to vector<8xf32>
    %10 = vector.shape_cast %9 : vector<8xf32> to vector<8x1xf32>
    %11 = vector.broadcast %10 : vector<8x1xf32> to vector<8x128xf32>
    %12 = arith.cmpf oeq, %7, %11 : vector<8x128xf32>
    %c128_i32 = arith.constant 128 : i32
    %13 = vector.broadcast %c128_i32 : i32 to vector<8x128xi32>
    %14 = arith.select %12, %8, %13 : vector<8x128xi1>, vector<8x128xi32>
    %cst_7 = arith.constant dense<2147483647> : vector<8xi32>
    %15 = vector.multi_reduction <minsi>, %14, %cst_7 [1] : vector<8x128xi32> to vector<8xi32>
    %16 = vector.shape_cast %15 : vector<8xi32> to vector<8x1xi32>
    %17 = vector.broadcast %16 : vector<8x1xi32> to vector<8x128xi32>
    %18 = arith.cmpi eq, %8, %17 : vector<8x128xi32>
    %19 = arith.extui %18 : vector<8x128xi1> to vector<8x128xi32>
    %20 = arith.sitofp %19 : vector<8x128xi32> to vector<8x128xf32>
    %cst_8 = arith.constant dense<0.000000e+00> : vector<8x192xf32>
    %21 = tpu.matmul %20, %1, %cst_8 {dimension_numbers = #tpu.dot_dimension_numbers<[1], [0], [0], [1], [0, 0, 1, 1], [], []>} : vector<8x128xf32>, vector<128x192xf32>, vector<8x192xf32> -> vector<8x192xf32>
    %22 = tpu.iota {dimensions = array<i32: 1>} : vector<1x128xi32>
    %23 = arith.sitofp %22 : vector<1x128xi32> to vector<1x128xf32>
    %cst_9 = arith.constant dense<0.000000e+00> : vector<1x8xf32>
    %24 = tpu.matmul %23, %20, %cst_9 {dimension_numbers = #tpu.dot_dimension_numbers<[1], [1], [0], [0], [0, 0, 1, 0], [], []>} : vector<1x128xf32>, vector<8x128xf32>, vector<1x8xf32> -> vector<1x8xf32>
    %25 = arith.fptosi %24 : vector<1x8xf32> to vector<1x8xi32>
    %26 = vector.shape_cast %25 : vector<1x8xi32> to vector<1x1x8xi32>
    %c0_10 = arith.constant 0 : index
    %c0_11 = arith.constant 0 : index
    %c0_12 = arith.constant 0 : index
    %27 = vector.load %arg5[%c0_10, %c0_11, %c0_12] : memref<1x1x8xi32, #tpu.memory_space<vmem>>, vector<1x1x8xi32>
    tpu.vector_store %arg5[%c0_10, %c0_11, %c0_12], %26 {strides = array<i32>} : memref<1x1x8xi32, #tpu.memory_space<vmem>>, vector<1x1x8xi32>,
    %c0_13 = arith.constant 0 : index
    %c0_14 = arith.constant 0 : index
    %28 = vector.load %arg4[%c0_13, %c0_14] : memref<8x192xf32, #tpu.memory_space<vmem>>, vector<8x192xf32>
    tpu.vector_store %arg4[%c0_13, %c0_14], %21 {strides = array<i32>} : memref<8x192xf32, #tpu.memory_space<vmem>>, vector<8x192xf32>,
    %29 = arith.subf %21, %0 : vector<8x192xf32>
    %30 = arith.mulf %29, %29 : vector<8x192xf32>
    %cst_15 = arith.constant dense<0.000000e+00> : vector<192xf32>
    %31 = vector.multi_reduction <add>, %30, %cst_15 [0] : vector<8x192xf32> to vector<192xf32>
    %32 = vector.shape_cast %31 : vector<192xf32> to vector<1x192xf32>
    %33 = vector.shape_cast %32 : vector<1x192xf32> to vector<1x1x192xf32>
    %c0_16 = arith.constant 0 : index
    %c0_17 = arith.constant 0 : index
    %c0_18 = arith.constant 0 : index
    %34 = vector.load %arg6[%c0_16, %c0_17, %c0_18] : memref<1x1x192xf32, #tpu.memory_space<vmem>>, vector<1x1x192xf32>
    tpu.vector_store %arg6[%c0_16, %c0_17, %c0_18], %33 {strides = array<i32>} : memref<1x1x192xf32, #tpu.memory_space<vmem>>, vector<1x1x192xf32>,
    return
  }
  func.func @transform_0(%arg0: i32) -> (i32, i32) {
    %c0_i32 = arith.constant 0 : i32
    %c0_i32_0 = arith.constant 0 : i32
    return %arg0, %c0_i32 : i32, i32
  }
  func.func @transform_1(%arg0: i32) -> (i32, i32) {
    %c0_i32 = arith.constant 0 : i32
    %c0_i32_0 = arith.constant 0 : i32
    %c0_i32_1 = arith.constant 0 : i32
    return %c0_i32, %c0_i32_0 : i32, i32
  }
  func.func @transform_2(%arg0: i32) -> (i32, i32) {
    %c0_i32 = arith.constant 0 : i32
    %c0_i32_0 = arith.constant 0 : i32
    %c0_i32_1 = arith.constant 0 : i32
    return %c0_i32, %c0_i32_0 : i32, i32
  }
  func.func @transform_3(%arg0: i32) -> (i32, i32) {
    %c0_i32 = arith.constant 0 : i32
    %c0_i32_0 = arith.constant 0 : i32
    return %arg0, %c0_i32 : i32, i32
  }
  func.func @transform_4(%arg0: i32) -> (i32, i32, i32) {
    %c0_i32 = arith.constant 0 : i32
    %c0_i32_0 = arith.constant 0 : i32
    %c0_i32_1 = arith.constant 0 : i32
    return %arg0, %c0_i32, %c0_i32_0 : i32, i32, i32
  }
  func.func @transform_5(%arg0: i32) -> (i32, i32, i32) {
    %c0_i32 = arith.constant 0 : i32
    %c0_i32_0 = arith.constant 0 : i32
    %c0_i32_1 = arith.constant 0 : i32
    return %arg0, %c0_i32, %c0_i32_0 : i32, i32, i32
  }
}

</mosaic_0001>

<llo_original>
// kernel: _vq_gcn_forward.1
$region0: #{_vq_gcn_forward.1}
  #allocation0 [shape = 'u32[]', space=smem, size = 0x4, offset = 0x4, fixed_abs, tag = 'smem constant byte address 0x4 - core index']
  #allocation1 [shape = 'u32[144,128]{1,0:T(1,128)}', space=vmem, size = 0x12000, scoped, tag = 'internal scratch']
  %s0 = inlined_call_operand.vmem [shape: f32[8,192], index: 0, kind: input, shape index: {}]
  %s1 = inlined_call_operand.vmem [shape: f32[128,192], index: 1, kind: input, shape index: {}]
  %s2 = inlined_call_operand.vmem [shape: f32[1,128], index: 2, kind: input, shape index: {}]
  %s3 = inlined_call_operand.hbm [shape: f32[8,192], index: 3, kind: output, shape index: {0}]
  %s4 = inlined_call_operand.hbm [shape: s32[1,1,8], index: 4, kind: output, shape index: {1}]
  %s5 = inlined_call_operand.vmem [shape: f32[1,1,192], index: 5, kind: output, shape index: {2}]
  %6 = xla_tuple %s3, %s4, %s5
  %s7 = sld [smem:[#allocation0]]
  $region38: #{_vq_gcn_forward.1} parent=0
    _
  %s9 = ssub.s32 1, %s7
  %s10 = scalar_select 0, %s9, %s7
  $region1: #{_vq_gcn_forward.1} parent=0
    #allocation2 [shape = 'u8[8192]{0}', space=vmem, size = 0x2000, scoped, tag = 'output window, operand 0, single buffered']
    #allocation3 [shape = 's32[1]{0}', space=sflag, size = 0x4, scoped, tag = 'scoped memory for _vq_gcn_forward.1']
    #allocation4 [shape = 'u8[512]{0}', space=vmem, size = 0x400, scoped, tag = 'output window, operand 1, single buffered']
    #allocation5 [shape = 's32[1]{0}', space=sflag, size = 0x4, scoped, tag = 'scoped memory for _vq_gcn_forward.1']
    %11 = vsyncpa [#allocation3], 0
    %12 = vsyncpa [#allocation5], 0
    // Predicated region
    $region2: #{_vq_gcn_forward.1} parent=1 // pred_check
      _
    $region3: #{_vq_gcn_forward.1} parent=1 // pred_check_branch
      %14 = sbr.rel (0) target = $region5
    $region4: #{_vq_gcn_forward.1} parent=1 // pred_region
      _
    $region5: #{_vq_gcn_forward.1} parent=1 // pred_fallthru
      _
    // Predicated region
    $region6: #{_vq_gcn_forward.1} parent=1 // pred_check
      _
    $region7: #{_vq_gcn_forward.1} parent=1 // pred_check_branch
      %16 = sbr.rel (0) target = $region9
    $region8: #{_vq_gcn_forward.1} parent=1 // pred_region
      _
    $region9: #{_vq_gcn_forward.1} parent=1 // pred_fallthru
      _
    // Predicated region
    $region10: #{_vq_gcn_forward.1} parent=1 // pred_check
      _
    $region11: #{_vq_gcn_forward.1} parent=1 // pred_check_branch
      %18 = sbr.rel (0) target = $region13
    $region12: #{_vq_gcn_forward.1} parent=1 // pred_region
      _
    $region13: #{_vq_gcn_forward.1} parent=1 // pred_fallthru
      _
    %v19 = vld [vmem:[%s0] sm:$0xff]
    %v20 = vld [vmem:[%s0 + $0x8] sm:$0xff]
    %v21 = vld [vmem:[%s1] sm:$0xff]
    %v22 = vld [vmem:[%s1 + $0x8] sm:$0xff]
    %v23 = vld [vmem:[%s1 + $0x10] sm:$0xff]
    %v24 = vld [vmem:[%s1 + $0x18] sm:$0xff]
    %v25 = vld [vmem:[%s1 + $0x20] sm:$0xff]
    %v26 = vld [vmem:[%s1 + $0x28] sm:$0xff]
    %v27 = vld [vmem:[%s1 + $0x30] sm:$0xff]
    %v28 = vld [vmem:[%s1 + $0x38] sm:$0xff]
    %v29 = vld [vmem:[%s1 + $0x40] sm:$0xff]
    %v30 = vld [vmem:[%s1 + $0x48] sm:$0xff]
    %v31 = vld [vmem:[%s1 + $0x50] sm:$0xff]
    %v32 = vld [vmem:[%s1 + $0x58] sm:$0xff]
    %v33 = vld [vmem:[%s1 + $0x60] sm:$0xff]
    %v34 = vld [vmem:[%s1 + $0x68] sm:$0xff]
    %v35 = vld [vmem:[%s1 + $0x70] sm:$0xff]
    %v36 = vld [vmem:[%s1 + $0x78] sm:$0xff]
    %v37 = vld [vmem:[%s1 + $0x80] sm:$0xff]
    %v38 = vld [vmem:[%s1 + $0x88] sm:$0xff]
    %v39 = vld [vmem:[%s1 + $0x90] sm:$0xff]
    %v40 = vld [vmem:[%s1 + $0x98] sm:$0xff]
    %v41 = vld [vmem:[%s1 + $0xa0] sm:$0xff]
    %v42 = vld [vmem:[%s1 + $0xa8] sm:$0xff]
    %v43 = vld [vmem:[%s1 + $0xb0] sm:$0xff]
    %v44 = vld [vmem:[%s1 + $0xb8] sm:$0xff]
    %v45 = vld [vmem:[%s1 + $0xc0] sm:$0xff]
    %v46 = vld [vmem:[%s1 + $0xc8] sm:$0xff]
    %v47 = vld [vmem:[%s1 + $0xd0] sm:$0xff]
    %v48 = vld [vmem:[%s1 + $0xd8] sm:$0xff]
    %v49 = vld [vmem:[%s1 + $0xe0] sm:$0xff]
    %v50 = vld [vmem:[%s1 + $0xe8] sm:$0xff]
    %v51 = vld [vmem:[%s1 + $0xf0] sm:$0xff]
    %v52 = vld [vmem:[%s1 + $0xf8] sm:$0xff]
    %vm53 = vcmask 523264
    %v55 = vsel %vm53, %v20, 0
    %v58 = vsel %vm53, %v22, 0
    %v61 = vsel %vm53, %v24, 0
    %v64 = vsel %vm53, %v26, 0
    %v67 = vsel %vm53, %v28, 0
    %v70 = vsel %vm53, %v30, 0
    %v73 = vsel %vm53, %v32, 0
    %v76 = vsel %vm53, %v34, 0
    %v79 = vsel %vm53, %v36, 0
    %v82 = vsel %vm53, %v38, 0
    %v85 = vsel %vm53, %v40, 0
    %v88 = vsel %vm53, %v42, 0
    %v91 = vsel %vm53, %v44, 0
    %v94 = vsel %vm53, %v46, 0
    %v97 = vsel %vm53, %v48, 0
    %v100 = vsel %vm53, %v50, 0
    %v103 = vsel %vm53, %v52, 0
    %105 = vmatprep.subr.mxu0 %v103
    %106 = vmatpush1.xpose.msra.mxu0 %v51
    %107 = vmatprep.subr.mxu0 %v100
    %108 = vmatpush1.xpose.msra.mxu0 %v49
    %109 = vmatprep.subr.mxu0 %v97
    %110 = vmatpush1.xpose.msra.mxu0 %v47
    %111 = vmatprep.subr.mxu0 %v94
    %112 = vmatpush1.xpose.msra.mxu0 %v45
    %113 = vmatprep.subr.mxu0 %v91
    %114 = vmatpush1.xpose.msra.mxu0 %v43
    %115 = vmatprep.subr.mxu0 %v88
    %116 = vmatpush1.xpose.msra.mxu0 %v41
    %117 = vmatprep.subr.mxu0 %v85
    %118 = vmatpush1.xpose.msra.mxu0 %v39
    %119 = vmatprep.subr.mxu0 %v82
    %120 = vmatpush1.xpose.msra.mxu0 %v37
    %121 = vmatprep.subr.mxu0 %v79
    %122 = vmatpush1.xpose.msra.mxu0 %v35
    %123 = vmatprep.subr.mxu0 %v76
    %124 = vmatpush1.xpose.msra.mxu0 %v33
    %125 = vmatprep.subr.mxu0 %v73
    %126 = vmatpush1.xpose.msra.mxu0 %v31
    %127 = vmatprep.subr.mxu0 %v70
    %128 = vmatpush1.xpose.msra.mxu0 %v29
    %129 = vmatprep.subr.mxu0 %v67
    %130 = vmatpush1.xpose.msra.mxu0 %v27
    %131 = vmatprep.subr.mxu0 %v64
    %132 = vmatpush1.xpose.msra.mxu0 %v25
    %133 = vmatprep.subr.mxu0 %v61
    %134 = vmatpush1.xpose.msra.mxu0 %v23
    %135 = vmatprep.subr.mxu0 %v58
    %136 = vmatpush1.xpose.msra.mxu0 %v21
    %137 = vmatprep.subr.mxu0 0.0
    %138 = vmatpush2.xpose.msra.mxu0 0.0
    %139 = vmatprep.subr.mxu0 0.0
    %140 = vmatpush2.xpose.msra.mxu0 0.0
    %141 = vmatprep.subr.mxu0 0.0
    %142 = vmatpush2.xpose.msra.mxu0 0.0
    %143 = vmatprep.subr.mxu0 0.0
    %144 = vmatpush2.xpose.msra.mxu0 0.0
    %145 = vmatprep.subr.mxu0 0.0
    %146 = vmatpush2.xpose.msra.mxu0 0.0
    %147 = vmatprep.subr.mxu0 0.0
    %148 = vmatpush2.xpose.msra.mxu0 0.0
    %149 = vmatprep.subr.mxu0 0.0
    %150 = vmatpush2.xpose.msra.mxu0 0.0
    %151 = vmatprep.subr.mxu0 0.0
    %152 = vmatpush2.xpose.msra.mxu0 0.0
    %153 = vmatprep.subr.mxu0 0.0
    %154 = vmatpush2.xpose.msra.mxu0 0.0
    %155 = vmatprep.subr.mxu0 0.0
    %156 = vmatpush2.xpose.msra.mxu0 0.0
    %157 = vmatprep.subr.mxu0 0.0
    %158 = vmatpush2.xpose.msra.mxu0 0.0
    %159 = vmatprep.subr.mxu0 0.0
    %160 = vmatpush2.xpose.msra.mxu0 0.0
    %161 = vmatprep.subr.mxu0 0.0
    %162 = vmatpush2.xpose.msra.mxu0 0.0
    %163 = vmatprep.subr.mxu0 0.0
    %164 = vmatpush2.xpose.msra.mxu0 0.0
    %165 = vmatprep.subr.mxu0 0.0
    %166 = vmatpush2.xpose.msra.mxu0 0.0
    %167 = vmatprep.subr.mxu0 0.0
    %168 = vmatpush2.xpose.msra.mxu0 0.0
    %169 = vmatprep.mubr.f32.mxu0 %v55
    %170 = vmatmul.mubr.f32.gmra.mxu0 %v19
    %v171 = vpop.f32.mrf.mxu0
    %v172 = vadd.f32 0.0, %v171
    %v173 = vpop.f32.mrf.mxu0
    %174 = vdwg.mxu0
    %v175 = vld [vmem:[%s2] sm:$0x1]
    %v176 = vmul.f32 %v172, 2.0
    %v178 = vlaneseq
    %v179 = vshrl.u32 %v178, 7
    %v180 = vsub.s32 0, %v179
    %v181 = vrot.slane %v175, %v180
    %v183 = vsub.f32 %v181, %v176
    %v184 = vlaneseq
    %v185 = vand.u32 %v184, 127
    %186 = vmin.xlane.f32.xlu0 %v183
    %v187 = vpop.xlane.xlu0 %186
    %vm188 = vcmp.eq.f32.partialorder %v183, %v187
    %v189 = vsel %vm188, %v185, 128
    %v190 = vand.u32 %v189, 65535
    %v191 = vshra.s32 %v189, 16
    %v192 = vcvt.s32.f32 %v190
    %v193 = vcvt.s32.f32 %v191
    %194 = vmin.xlane.f32.xlu0 %v193
    %v195 = vpop.xlane.xlu0 %194
    %vm196 = vcmp.eq.f32.partialorder %v193, %v195
    %v197 = vsel %vm196, %v192, inf
    %198 = vmin.xlane.f32.xlu0 %v197
    %v199 = vpop.xlane.xlu0 %198
    %v200 = vcvt.f32.s32 %v199
    %v201 = vcvt.f32.s32 %v195
    %v202 = vshll.u32 %v201, 16
    %v203 = vadd.s32 %v202, %v200
    %vm204 = vcmp.eq.s32.totalorder %v185, %v203
    %v205 = vsel %vm204, 1, 0
    %v206 = vcvt.s32.f32 %v205
    %207 = vmatprep.subr.mxu0 %v52
    %208 = vmatpush1.msra.mxu0 %v51
    %209 = vmatprep.subr.mxu0 %v50
    %210 = vmatpush1.msra.mxu0 %v49
    %211 = vmatprep.subr.mxu0 %v48
    %212 = vmatpush1.msra.mxu0 %v47
    %213 = vmatprep.subr.mxu0 %v46
    %214 = vmatpush1.msra.mxu0 %v45
    %215 = vmatprep.subr.mxu0 %v44
    %216 = vmatpush1.msra.mxu0 %v43
    %217 = vmatprep.subr.mxu0 %v42
    %218 = vmatpush1.msra.mxu0 %v41
    %219 = vmatprep.subr.mxu0 %v40
    %220 = vmatpush1.msra.mxu0 %v39
    %221 = vmatprep.subr.mxu0 %v38
    %222 = vmatpush1.msra.mxu0 %v37
    %223 = vmatprep.subr.mxu0 %v36
    %224 = vmatpush1.msra.mxu0 %v35
    %225 = vmatprep.subr.mxu0 %v34
    %226 = vmatpush1.msra.mxu0 %v33
    %227 = vmatprep.subr.mxu0 %v32
    %228 = vmatpush1.msra.mxu0 %v31
    %229 = vmatprep.subr.mxu0 %v30
    %230 = vmatpush1.msra.mxu0 %v29
    %231 = vmatprep.subr.mxu0 %v28
    %232 = vmatpush1.msra.mxu0 %v27
    %233 = vmatprep.subr.mxu0 %v26
    %234 = vmatpush1.msra.mxu0 %v25
    %235 = vmatprep.subr.mxu0 %v24
    %236 = vmatpush1.msra.mxu0 %v23
    %237 = vmatprep.subr.mxu0 %v22
    %238 = vmatpush1.msra.mxu0 %v21
    %239 = vmatprep.subr.mxu0 0.0
    %240 = vmatpush2.msra.mxu0 0.0
    %241 = vmatprep.subr.mxu0 0.0
    %242 = vmatpush2.msra.mxu0 0.0
    %243 = vmatprep.subr.mxu0 0.0
    %244 = vmatpush2.msra.mxu0 0.0
    %245 = vmatprep.subr.mxu0 0.0
    %246 = vmatpush2.msra.mxu0 0.0
    %247 = vmatprep.subr.mxu0 0.0
    %248 = vmatpush2.msra.mxu0 0.0
    %249 = vmatprep.subr.mxu0 0.0
    %250 = vmatpush2.msra.mxu0 0.0
    %251 = vmatprep.subr.mxu0 0.0
    %252 = vmatpush2.msra.mxu0 0.0
    %253 = vmatprep.subr.mxu0 0.0
    %254 = vmatpush2.msra.mxu0 0.0
    %255 = vmatprep.subr.mxu0 0.0
    %256 = vmatpush2.msra.mxu0 0.0
    %257 = vmatprep.subr.mxu0 0.0
    %258 = vmatpush2.msra.mxu0 0.0
    %259 = vmatprep.subr.mxu0 0.0
    %260 = vmatpush2.msra.mxu0 0.0
    %261 = vmatprep.subr.mxu0 0.0
    %262 = vmatpush2.msra.mxu0 0.0
    %263 = vmatprep.subr.mxu0 0.0
    %264 = vmatpush2.msra.mxu0 0.0
    %265 = vmatprep.subr.mxu0 0.0
    %266 = vmatpush2.msra.mxu0 0.0
    %267 = vmatprep.subr.mxu0 0.0
    %268 = vmatpush2.msra.mxu0 0.0
    %269 = vmatprep.subr.mxu0 0.0
    %270 = vmatpush2.msra.mxu0 0.0
    %271 = vmatprep.mubr.f32.mxu0 0.0
    %272 = vmatmul.mubr.f32.gmra.mxu0 %v206
    %v273 = vpop.f32.mrf.mxu0
    %v274 = vadd.f32 0.0, %v273
    %v275 = vpop.f32.mrf.mxu0
    %v276 = vadd.f32 0.0, %v275
    %277 = vdwg.mxu0
    %v278 = vcvt.s32.f32 %v185
    %279 = vmatprep.subr.mxu0 0.0
    %280 = vmatpush1.xpose.msra.mxu0 0.0
    %281 = vmatprep.subr.mxu0 0.0
    %282 = vmatpush1.xpose.msra.mxu0 0.0
    %283 = vmatprep.subr.mxu0 0.0
    %284 = vmatpush1.xpose.msra.mxu0 0.0
    %285 = vmatprep.subr.mxu0 0.0
    %286 = vmatpush1.xpose.msra.mxu0 0.0
    %287 = vmatprep.subr.mxu0 0.0
    %288 = vmatpush1.xpose.msra.mxu0 0.0
    %289 = vmatprep.subr.mxu0 0.0
    %290 = vmatpush1.xpose.msra.mxu0 0.0
    %291 = vmatprep.subr.mxu0 0.0
    %292 = vmatpush1.xpose.msra.mxu0 0.0
    %293 = vmatprep.subr.mxu0 0.0
    %294 = vmatpush1.xpose.msra.mxu0 0.0
    %295 = vmatprep.subr.mxu0 0.0
    %296 = vmatpush1.xpose.msra.mxu0 0.0
    %297 = vmatprep.subr.mxu0 0.0
    %298 = vmatpush1.xpose.msra.mxu0 0.0
    %299 = vmatprep.subr.mxu0 0.0
    %300 = vmatpush1.xpose.msra.mxu0 0.0
    %301 = vmatprep.subr.mxu0 0.0
    %302 = vmatpush1.xpose.msra.mxu0 0.0
    %303 = vmatprep.subr.mxu0 0.0
    %304 = vmatpush1.xpose.msra.mxu0 0.0
    %305 = vmatprep.subr.mxu0 0.0
    %306 = vmatpush1.xpose.msra.mxu0 0.0
    %307 = vmatprep.subr.mxu0 0.0
    %308 = vmatpush1.xpose.msra.mxu0 0.0
    %309 = vmatprep.subr.mxu0 0.0
    %310 = vmatpush1.xpose.msra.mxu0 %v206
    %311 = vmatprep.subr.mxu0 0.0
    %312 = vmatpush2.xpose.msra.mxu0 0.0
    %313 = vmatprep.subr.mxu0 0.0
    %314 = vmatpush2.xpose.msra.mxu0 0.0
    %315 = vmatprep.subr.mxu0 0.0
    %316 = vmatpush2.xpose.msra.mxu0 0.0
    %317 = vmatprep.subr.mxu0 0.0
    %318 = vmatpush2.xpose.msra.mxu0 0.0
    %319 = vmatprep.subr.mxu0 0.0
    %320 = vmatpush2.xpose.msra.mxu0 0.0
    %321 = vmatprep.subr.mxu0 0.0
    %322 = vmatpush2.xpose.msra.mxu0 0.0
    %323 = vmatprep.subr.mxu0 0.0
    %324 = vmatpush2.xpose.msra.mxu0 0.0
    %325 = vmatprep.subr.mxu0 0.0
    %326 = vmatpush2.xpose.msra.mxu0 0.0
    %327 = vmatprep.subr.mxu0 0.0
    %328 = vmatpush2.xpose.msra.mxu0 0.0
    %329 = vmatprep.subr.mxu0 0.0
    %330 = vmatpush2.xpose.msra.mxu0 0.0
    %331 = vmatprep.subr.mxu0 0.0
    %332 = vmatpush2.xpose.msra.mxu0 0.0
    %333 = vmatprep.subr.mxu0 0.0
    %334 = vmatpush2.xpose.msra.mxu0 0.0
    %335 = vmatprep.subr.mxu0 0.0
    %336 = vmatpush2.xpose.msra.mxu0 0.0
    %337 = vmatprep.subr.mxu0 0.0
    %338 = vmatpush2.xpose.msra.mxu0 0.0
    %339 = vmatprep.subr.mxu0 0.0
    %340 = vmatpush2.xpose.msra.mxu0 0.0
    %341 = vmatprep.subr.mxu0 0.0
    %342 = vmatpush2.xpose.msra.mxu0 0.0
    %343 = vmatprep.mubr.f32.mxu0 0.0
    %344 = vmatmul.mubr.f32.gmra.mxu0 %v278
    %v345 = vpop.f32.mrf.mxu0
    %v346 = vadd.f32 0.0, %v345
    %v347 = vpop.f32.mrf.mxu0
    %348 = vdwg.mxu0
    %v349 = vcvt.f32.s32.to.zero.pseudo %v346
    %vm350 = vcmask 57344
    %351 = vst.msk [vmem:[#allocation4] sm:$0x1] %vm350, %v349
    %352 = vst [vmem:[#allocation2] sm:$0xff] %v274
    %353 = vst.msk [vmem:[#allocation2 + $0x8] sm:$0xff] %vm53, %v276
    %v354 = vsub.f32 %v274, %v19
    %v355 = vsub.f32 %v276, %v20
    %v356 = vmul.f32 %v354, %v354
    %v357 = vmul.f32 %v355, %v355
    %v358 = vrot.slane %v356, 4
    %v359 = vadd.f32 %v356, %v358
    %v360 = vrot.slane %v359, 2
    %v361 = vadd.f32 %v359, %v360
    %v362 = vrot.slane %v361, 1
    %v363 = vadd.f32 %v361, %v362
    %v364 = vsel %vm53, %v357, 0.0
    %v365 = vrot.slane %v364, 4
    %v366 = vadd.f32 %v364, %v365
    %v367 = vrot.slane %v366, 2
    %v368 = vadd.f32 %v366, %v367
    %v369 = vrot.slane %v368, 1
    %v370 = vadd.f32 %v368, %v369
    %v373 = vcombine.low %v363, %v370
    %v375 = vunpack.c.l.s4 1966171168
    %v376 = vunpack.c.0.s8 %v375
    %v377 = vlaneseq
    %v378 = vshrl.u32 %v377, 7
    %v379 = vsub.s32 %v376, %v378
    %v380 = vrot.slane %v373, %v379
    %v382 = vunpack.c.l.s4 1966171168
    %v383 = vunpack.c.0.s8 %v382
    %v384 = vlaneseq
    %v385 = vshrl.u32 %v384, 7
    %v386 = vsub.s32 %v383, %v385
    %v387 = vrot.slane %v380, %v386
    %v389 = vlaneseq
    %vm390 = vcmp.ge.s32.totalorder %v389, 0
    %vm391 = vcmp.lt.s32.totalorder %v389, 192
    %vm392 = vmand %vm390, %vm391
    %393 = vst.msk [vmem:[%s5] sm:$0x3] %vm392, %v387
    // Predicated region
    $region14: #{_vq_gcn_forward.1} parent=1 // pred_check
      _
    $region15: #{_vq_gcn_forward.1} parent=1 // pred_check_branch
      %395 = sbr.rel (0) target = $region17
    $region16: #{_vq_gcn_forward.1} parent=1 // pred_region
      %s397 = ssub.s32 256, 256
      %398 = vsyncadd [#allocation3], %s397
      %s400 = sshll.u32 [#allocation2], 4
      %s401 = int_to_ptr.vmem [resolvable:$true] %s400
      %403 = dma.vmem_to_hbm [thread:$0]  %s401, 256, %s3, [#allocation3]
    $region17: #{_vq_gcn_forward.1} parent=1 // pred_fallthru
      _
    // Predicated region
    $region18: #{_vq_gcn_forward.1} parent=1 // pred_check
      _
    $region19: #{_vq_gcn_forward.1} parent=1 // pred_check_branch
      %405 = sbr.rel (0) target = $region21
    $region20: #{_vq_gcn_forward.1} parent=1 // pred_region
      %s407 = ssub.s32 16, 16
      %408 = vsyncadd [#allocation5], %s407
      %s410 = sshll.u32 [#allocation4], 4
      %s411 = int_to_ptr.vmem [resolvable:$true] %s410
      %413 = dma.vmem_to_hbm [thread:$0]  %s411, 16, %s4, [#allocation5]
    $region21: #{_vq_gcn_forward.1} parent=1 // pred_fallthru
      _
    // Predicated region
    $region22: #{_vq_gcn_forward.1} parent=1 // pred_check
      _
    $region23: #{_vq_gcn_forward.1} parent=1 // pred_check_branch
      %415 = sbr.rel (0) target = $region25
    $region24: #{_vq_gcn_forward.1} parent=1 // pred_region
      _
    $region25: #{_vq_gcn_forward.1} parent=1 // pred_fallthru
      _
    // Predicated region
    $region26: #{_vq_gcn_forward.1} parent=1 // pred_check
      _
    $region27: #{_vq_gcn_forward.1} parent=1 // pred_check_branch
      %417 = sbr.rel (0) target = $region29
    $region28: #{_vq_gcn_forward.1} parent=1 // pred_region
      %418 = dma.done [#allocation3], 256
    $region29: #{_vq_gcn_forward.1} parent=1 // pred_fallthru
      _
    // Predicated region
    $region30: #{_vq_gcn_forward.1} parent=1 // pred_check
      _
    $region31: #{_vq_gcn_forward.1} parent=1 // pred_check_branch
      %420 = sbr.rel (0) target = $region33
    $region32: #{_vq_gcn_forward.1} parent=1 // pred_region
      %421 = dma.done [#allocation5], 16
    $region33: #{_vq_gcn_forward.1} parent=1 // pred_fallthru
      _
    // Predicated region
    $region34: #{_vq_gcn_forward.1} parent=1 // pred_check
      _
    $region35: #{_vq_gcn_forward.1} parent=1 // pred_check_branch
      %423 = sbr.rel (0) target = $region37
    $region36: #{_vq_gcn_forward.1} parent=1 // pred_region
      _
    $region37: #{_vq_gcn_forward.1} parent=1 // pred_fallthru
      _
    %424 = vsyncpa [#allocation3], 1
    %425 = vsyncpa [#allocation5], 1

</llo_original>
